<compile_context>
chip_gen: v6e
topology: v6e:2x2x1
jax: 0.10.0
libtpu: 0.0.40
codegen_flags: <defaults>
</compile_context>

<pallas_src>
import math
import jax
import jax.numpy as jnp
from jax.experimental import pallas as pl
from jax.experimental.pallas import tpu as pltpu


def _pe_add_kernel(x_ref, pe_ref, o_ref):
    # x_ref: (ts, tc)   pe_ref: (1, tc), sublane-broadcast over the row axis.
    o_ref[...] = x_ref[...] + pe_ref[...]


def make_pe(d_model: int, max_len: int = 5000, dtype=jnp.float32):
    """Deterministic reconstruction of the module's registered buffer `pe`."""
    position = jnp.arange(max_len, dtype=jnp.float32)[:, None]              # (max_len, 1)
    div_term = jnp.exp(
        jnp.arange(0, d_model, 2, dtype=jnp.float32) * (-math.log(10000.0) / d_model)
    )                                                                        # (ceil(d/2),)
    pe = jnp.zeros((max_len, 1, d_model), dtype=dtype)
    pe = pe.at[:, 0, 0::2].set(jnp.sin(position * div_term).astype(dtype))
    # floor(d/2) cos terms so odd d_model does not shape-mismatch (the PyTorch
    # tutorial code would error on odd d_model; benign deviation, even d is exact).
    pe = pe.at[:, 0, 1::2].set(jnp.cos(position * div_term[: d_model // 2]).astype(dtype))
    return pe


def _choose_tiles(R, W, itemsize, sublane, target_bytes):
    """Pick (ts, tc): ~target_bytes per block, sublane/lane aligned, prefer >=4
    seq tiles (v7x 2-TC sharding) and a non-ragged split of R."""
    row_bytes = W * itemsize

    # Very wide rows: tile the lane axis in multiples of 128 instead of dropping
    # below the 8-sublane minimum / blowing the (smaller v7x) VMEM budget.
    if sublane * row_bytes > target_bytes and W > 128:
        tc = (target_bytes // (sublane * itemsize)) // 128 * 128
        tc = int(max(128, min(tc, W)))
        return int(sublane), tc

    tc = W
    ts = max(1, target_bytes // max(1, row_bytes))
    # Keep >=4 grid steps when blocks would still be >=~512 KiB, so both v7x
    # TensorCores stream (no-op / harmless on single-TC v5e/v6e).
    quarter = R // 4
    if quarter >= sublane and quarter * row_bytes >= (512 << 10):
        ts = min(ts, quarter)
    ts = min(ts, R)
    if ts < R:
        ts = min(R, max(sublane, ts - ts % sublane))   # dtype-aware sublane alignment
    if ts < R and ts % sublane == 0 and R % ts != 0:
        # Prefer a divisor of R (no masked epilogue tile), shrinking at most ~2x.
        lo = max(sublane, ts // 2)
        cand = ts
        while cand >= lo:
            if R % cand == 0:
                ts = cand
                break
            cand -= sublane
    return int(ts), int(tc)


def positional_encoding_forward(x, pe, *, tile_bytes=2 * 1024 * 1024):
    """x: [seq_len, batch, d_model]; pe: [max_len, 1, d_model] buffer.

    Faithful reproduction of the literal PyTorch forward:
        out[s, b, d] = x[s, b, d] + pe[b, 0, d]
    (pe is indexed by BATCH because pe[:x.size(0)] is applied AFTER the transpose.)
    """
    S, B, D = x.shape
    BD = B * D
    itemsize = jnp.dtype(x.dtype).itemsize
    sublane = max(8, 32 // itemsize)          # 8 (f32) / 16 (bf16) / 32 (int8, fp8)

    pe_row = pe[:B, 0, :].reshape(1, BD).astype(x.dtype)       # (1, B*D)

    # --- lane-dense layout: make the kernel's last dim a multiple of 128 -------
    g = 128 // math.gcd(BD, 128)              # minimal group so g*BD % 128 == 0
    if g > 1 and S % g == 0:
        R, W = S // g, g * BD
        x2 = x.reshape(R, W)                  # zero-cost row-major reshape
        pe_vec = jnp.tile(pe_row, (1, g))     # addend is periodic with period BD
    else:
        # Fallback (only when S is not a multiple of g): correct, but the sub-128
        # lane tail lowers to masked partial stores.
        g, R, W = 1, S, BD
        x2 = x.reshape(R, W)
        pe_vec = pe_row

    ts, tc = _choose_tiles(R, W, itemsize, sublane, int(tile_bytes))
    grid = (pl.cdiv(R, ts), pl.cdiv(W, tc))

    out2 = pl.pallas_call(
        _pe_add_kernel,
        out_shape=jax.ShapeDtypeStruct((R, W), x.dtype),
        grid_spec=pl.GridSpec(
            grid=grid,
            in_specs=[
                # streamed input tile, auto double-buffered by the Pallas pipeline
                pl.BlockSpec((ts, tc), lambda i, j: (i, j)),
                # pe: constant along the seq axis -> VMEM-resident per column tile
                pl.BlockSpec((1, tc), lambda i, j: (0, j)),
            ],
            out_specs=pl.BlockSpec((ts, tc), lambda i, j: (i, j)),
        ),
        compiler_params=pltpu.CompilerParams(
            # Both axes independent: lets v7x shard tiles across its 2 TensorCores.
            dimension_semantics=("parallel", "parallel"),
        ),
    )(x2, pe_vec)

    return out2.reshape(S, B, D)


if __name__ == "__main__":
    def reference(x, pe):
        b = x.shape[1]
        return jnp.transpose(
            jnp.transpose(x, (1, 0, 2)) + pe[:b].astype(x.dtype), (1, 0, 2)
        )

    # Case 1: module-sized toy shape (seq=8, batch=2, d_model=32).
    # B*D = 64 -> grouped by g=2 to a lane-dense (4, 128) layout.
    S, B, D = 8, 2, 32
    x = jax.random.normal(jax.random.PRNGKey(0), (S, B, D), dtype=jnp.float32)
    pe = make_pe(D, max_len=5000)
    out = jax.block_until_ready(positional_encoding_forward(x, pe))
    assert out.shape == (S, B, D)
    assert jnp.allclose(out, reference(x, pe), atol=1e-6), "mismatch (case 1)"

    # Case 2: multi-step, evenly divided grid (tile_bytes shrunk to force >1 step).
    # B*D = 192 -> g=2 -> (128, 384); tiles chosen as a divisor of 128 (no ragged tile).
    S2, B2, D2 = 256, 4, 48
    x2 = jax.random.normal(jax.random.PRNGKey(1), (S2, B2, D2), dtype=jnp.float32)
    pe2 = make_pe(D2, max_len=5000)
    out2 = jax.block_until_ready(
        positional_encoding_forward(x2, pe2, tile_bytes=64 * 1024)
    )
    assert out2.shape == (S2, B2, D2)
    assert jnp.allclose(out2, reference(x2, pe2), atol=1e-6), "mismatch (case 2)"

    # Case 3: bf16 (sublane packing 16) and S not divisible by the group factor
    # (exercises the masked-store fallback path).
    S3, B3, D3 = 7, 2, 32
    x3 = jax.random.normal(jax.random.PRNGKey(2), (S3, B3, D3), dtype=jnp.float32)
    x3 = x3.astype(jnp.bfloat16)
    pe3 = make_pe(D3, max_len=5000)
    out3 = jax.block_until_ready(positional_encoding_forward(x3, pe3))
    assert out3.shape == (S3, B3, D3)
    assert jnp.allclose(
        out3.astype(jnp.float32), reference(x3, pe3).astype(jnp.float32), atol=1e-2
    ), "mismatch (case 3)"

    print("KERNEL_OK")
</pallas_src>

<mosaic_0001>
module attributes {stable_mosaic.version = 11 : i64} {
  func.func @_pe_add_kernel(%arg0: i32, %arg1: i32, %arg2: memref<4x128xf32, #tpu.memory_space<vmem>>, %arg3: memref<1x128xf32, #tpu.memory_space<vmem>>, %arg4: memref<4x128xf32, #tpu.memory_space<vmem>>) attributes {dimension_semantics = [#tpu.dimension_semantics<parallel>, #tpu.dimension_semantics<parallel>], iteration_bounds = array<i64: 1, 1>, scalar_prefetch = 0 : i64, scratch_operands = 0 : i64, tpu.core_type = #tpu.core_type<tc>, window_params = [{transform_indices = @transform_0, window_bounds = array<i64: 4, 128>}, {transform_indices = @transform_1, window_bounds = array<i64: 1, 128>}, {transform_indices = @transform_2, window_bounds = array<i64: 4, 128>}]} {
    %c0 = arith.constant 0 : index
    %c0_0 = arith.constant 0 : index
    %0 = vector.load %arg2[%c0, %c0_0] : memref<4x128xf32, #tpu.memory_space<vmem>>, vector<4x128xf32>
    %c0_1 = arith.constant 0 : index
    %c0_2 = arith.constant 0 : index
    %1 = vector.load %arg3[%c0_1, %c0_2] : memref<1x128xf32, #tpu.memory_space<vmem>>, vector<1x128xf32>
    %2 = vector.broadcast %1 : vector<1x128xf32> to vector<4x128xf32>
    %3 = arith.addf %0, %2 : vector<4x128xf32>
    %c0_3 = arith.constant 0 : index
    %c0_4 = arith.constant 0 : index
    %4 = vector.load %arg4[%c0_3, %c0_4] : memref<4x128xf32, #tpu.memory_space<vmem>>, vector<4x128xf32>
    tpu.vector_store %arg4[%c0_3, %c0_4], %3 {strides = array<i32>} : memref<4x128xf32, #tpu.memory_space<vmem>>, vector<4x128xf32>,
    return
  }
  func.func @transform_0(%arg0: i32, %arg1: i32) -> (i32, i32) {
    %c0_i32 = arith.constant 0 : i32
    return %arg0, %arg1 : i32, i32
  }
  func.func @transform_1(%arg0: i32, %arg1: i32) -> (i32, i32) {
    %c0_i32 = arith.constant 0 : i32
    %c0_i32_0 = arith.constant 0 : i32
    return %c0_i32, %arg1 : i32, i32
  }
  func.func @transform_2(%arg0: i32, %arg1: i32) -> (i32, i32) {
    %c0_i32 = arith.constant 0 : i32
    return %arg0, %arg1 : i32, i32
  }
}

</mosaic_0001>

<llo_original>
// kernel: tpu_custom_call.1
$region0: #{tpu_custom_call.1}
  #allocation0 [shape = 'u32[]', space=smem, size = 0x4, offset = 0x4, fixed_abs, tag = 'smem constant byte address 0x4 - core index']
  #allocation1 [shape = 'u32[144,128]{1,0:T(1,128)}', space=vmem, size = 0x12000, scoped, tag = 'internal scratch']
  %s0 = inlined_call_operand.hbm [shape: f32[4,128], index: 0, kind: input, shape index: {}]
  %s1 = inlined_call_operand.vmem [shape: f32[1,128], index: 1, kind: input, shape index: {}]
  %s2 = inlined_call_operand.hbm [shape: f32[4,128], index: 2, kind: output, shape index: {}]
  %s3 = sld [smem:[#allocation0]]
  $region22: #{tpu_custom_call.1} parent=0
    _
  %s5 = ssub.s32 1, %s3
  %s6 = scalar_select 0, %s5, %s3
  $region1: #{tpu_custom_call.1} parent=0
    #allocation2 [shape = 'u8[2048]{0}', space=vmem, size = 0x800, scoped, tag = 'input window, operand 0, single buffered']
    #allocation3 [shape = 's32[1]{0}', space=sflag, size = 0x4, scoped, tag = 'scoped memory for tpu_custom_call.1']
    #allocation4 [shape = 's32[1]{0}', space=sflag, size = 0x4, scoped, tag = 'scoped memory for tpu_custom_call.1']
    #allocation5 [shape = 'u8[2048]{0}', space=vmem, size = 0x800, scoped, tag = 'output window, operand 0, single buffered']
    %7 = vsyncpa [#allocation3], 0
    %8 = vsyncpa [#allocation4], 0
    // Predicated region
    $region2: #{tpu_custom_call.1} parent=1 // pred_check
      _
    $region3: #{tpu_custom_call.1} parent=1 // pred_check_branch
      %10 = sbr.rel (0) target = $region5
    $region4: #{tpu_custom_call.1} parent=1 // pred_region
      %s12 = ssub.s32 64, 64
      %13 = vsyncadd [#allocation3], %s12
      %s15 = sshll.u32 [#allocation2], 4
      %s16 = int_to_ptr.vmem [resolvable:$true] %s15
      %18 = dma.hbm_to_vmem [thread:$0]  %s0, 64, %s16, [#allocation3]
    $region5: #{tpu_custom_call.1} parent=1 // pred_fallthru
      _
    // Predicated region
    $region6: #{tpu_custom_call.1} parent=1 // pred_check
      _
    $region7: #{tpu_custom_call.1} parent=1 // pred_check_branch
      %20 = sbr.rel (0) target = $region9
    $region8: #{tpu_custom_call.1} parent=1 // pred_region
      _
    $region9: #{tpu_custom_call.1} parent=1 // pred_fallthru
      _
    // Predicated region
    $region10: #{tpu_custom_call.1} parent=1 // pred_check
      _
    $region11: #{tpu_custom_call.1} parent=1 // pred_check_branch
      %22 = sbr.rel (0) target = $region13
    $region12: #{tpu_custom_call.1} parent=1 // pred_region
      %23 = dma.done [#allocation3], 64
    $region13: #{tpu_custom_call.1} parent=1 // pred_fallthru
      _
    %v24 = vld [vmem:[#allocation2] sm:$0xf]
    %v25 = vld [vmem:[%s1] sm:$0x1]
    %v27 = vlaneseq
    %v28 = vshrl.u32 %v27, 7
    %v29 = vsub.s32 0, %v28
    %v30 = vrot.slane %v25, %v29
    %v32 = vadd.f32 %v24, %v30
    %33 = vst [vmem:[#allocation5] sm:$0xf] %v32
    // Predicated region
    $region14: #{tpu_custom_call.1} parent=1 // pred_check
      _
    $region15: #{tpu_custom_call.1} parent=1 // pred_check_branch
      %35 = sbr.rel (0) target = $region17
    $region16: #{tpu_custom_call.1} parent=1 // pred_region
      %s37 = ssub.s32 64, 64
      %38 = vsyncadd [#allocation4], %s37
      %s40 = sshll.u32 [#allocation5], 4
      %s41 = int_to_ptr.vmem [resolvable:$true] %s40
      %43 = dma.vmem_to_hbm [thread:$0]  %s41, 64, %s2, [#allocation4]
    $region17: #{tpu_custom_call.1} parent=1 // pred_fallthru
      _
    // Predicated region
    $region18: #{tpu_custom_call.1} parent=1 // pred_check
      _
    $region19: #{tpu_custom_call.1} parent=1 // pred_check_branch
      %45 = sbr.rel (0) target = $region21
    $region20: #{tpu_custom_call.1} parent=1 // pred_region
      %46 = dma.done [#allocation4], 64
    $region21: #{tpu_custom_call.1} parent=1 // pred_fallthru
      _
    %47 = vsyncpa [#allocation3], 1
    %48 = vsyncpa [#allocation4], 1

</llo_original>
